<compile_context>
chip_gen: v6e
topology: v6e:2x2x1
jax: 0.10.0
libtpu: 0.0.40
codegen_flags: <defaults>
</compile_context>

<pallas_src>
import functools
import math

import jax
import jax.numpy as jnp
from jax.experimental import pallas as pl
from jax.experimental.pallas import tpu as pltpu


def _round_up(n: int, m: int) -> int:
    return ((n + m - 1) // m) * m


def _default_tanh_dtype():
    # bf16 tanh uses the bf16 EUP path on v6e/v7x; older chips (v5e etc.) have
    # no bf16 EUP, so keep tanh in f32 there (correct either way, this is a
    # perf-only choice).
    try:
        kind = jax.devices()[0].device_kind.lower()
    except Exception:
        return jnp.float32
    return jnp.bfloat16 if ("v6" in kind or "v7" in kind) else jnp.float32


# ----------------------------- Pallas kernel --------------------------------
def value_densenet_kernel(x_ref, w1_ref, b1_ref, w2_ref, b2_ref, w3_ref, b3_ref,
                          out_ref, *, tanh_dtype):
    # Layer 1: in-kernel bf16 cast of x, MXU matmul with f32 accumulation,
    # f32 bias add, tanh in `tanh_dtype` (bf16 on v6e/v7x, f32 elsewhere).
    x = x_ref[...].astype(jnp.bfloat16)
    a1 = jnp.dot(x, w1_ref[...], preferred_element_type=jnp.float32) + b1_ref[...]
    h = jnp.tanh(a1.astype(tanh_dtype)).astype(jnp.bfloat16)
    # Layer 2.
    a2 = jnp.dot(h, w2_ref[...], preferred_element_type=jnp.float32) + b2_ref[...]
    h = jnp.tanh(a2.astype(tanh_dtype)).astype(jnp.bfloat16)
    # Value head, lane-dense transposed form:
    #   (1, H) contracted with (TILE_B, H) over H  ->  (1, TILE_B)
    # (same contracted-last-dims structure as flash-attention's q @ k^T).
    v = jax.lax.dot_general(
        w3_ref[...], h,
        dimension_numbers=(((1,), (1,)), ((), ())),
        preferred_element_type=jnp.float32)
    out_ref[...] = (v + b3_ref[0, 0]).astype(out_ref.dtype)


# --------------------------------- wrapper -----------------------------------
def value_densenet_forward(x, params, *, tile_b=4096, tanh_dtype=None):
    """Pallas forward pass. x: (B, state_dim) f32. Returns (B, 1) f32."""
    B, state_dim = x.shape
    h1 = params["w1"].shape[1]
    h2 = params["w2"].shape[1]
    hp1 = _round_up(h1, 128)          # pad hidden widths to full lane width
    hp2 = _round_up(h2, 128)
    if tanh_dtype is None:
        tanh_dtype = _default_tanh_dtype()

    # Batch tiling: lane-multiple tiles, capped at 8192 for VMEM, at least 2
    # tiles when the batch allows it (keeps both v7x TensorCores busy).  The
    # last tile may overhang B: garbage rows are per-row independent and their
    # output columns are masked on writeback.
    tile_cap = max(128, min(_round_up(tile_b, 128), 8192))
    b_ceil = _round_up(B, 128)
    min_tiles = 2 if b_ceil >= 256 else 1
    num_tiles = max(min_tiles, pl.cdiv(b_ceil, tile_cap))
    tile_b = min(tile_cap, _round_up(pl.cdiv(b_ceil, num_tiles), 128))
    num_tiles = pl.cdiv(B, tile_b)

    def pad2(a, shape, dtype):
        z = jnp.zeros(shape, dtype)
        return z.at[:a.shape[0], :a.shape[1]].set(a.astype(dtype))

    # Only the (tiny) weights/biases are padded + cast in the wrapper; x is
    # passed straight through (no extra HBM pass over the dominant operand).
    w1p = pad2(params["w1"],                  (state_dim, hp1), jnp.bfloat16)
    b1p = pad2(params["b1"].reshape(1, h1),   (1, hp1),         jnp.float32)
    w2p = pad2(params["w2"],                  (hp1, hp2),       jnp.bfloat16)
    b2p = pad2(params["b2"].reshape(1, h2),   (1, hp2),         jnp.float32)
    w3p = pad2(params["w3"].reshape(h2, 1).T, (1, hp2),         jnp.bfloat16)
    b3p = params["b3"].reshape(1, 1).astype(jnp.float32)        # SMEM scalar

    kernel = functools.partial(value_densenet_kernel, tanh_dtype=tanh_dtype)

    out_row = pl.pallas_call(
        kernel,
        out_shape=jax.ShapeDtypeStruct((1, B), jnp.float32),
        grid_spec=pltpu.PrefetchScalarGridSpec(
            num_scalar_prefetch=0,
            grid=(num_tiles,),
            in_specs=[
                pl.BlockSpec((tile_b, state_dim), lambda i: (i, 0)),   # x tile (f32)
                pl.BlockSpec((state_dim, hp1), lambda i: (0, 0)),      # W1 (resident)
                pl.BlockSpec((1, hp1), lambda i: (0, 0)),              # b1
                pl.BlockSpec((hp1, hp2), lambda i: (0, 0)),            # W2
                pl.BlockSpec((1, hp2), lambda i: (0, 0)),              # b2
                pl.BlockSpec((1, hp2), lambda i: (0, 0)),              # W3 row
                pl.BlockSpec(memory_space=pltpu.MemorySpace.SMEM),     # b3 scalar
            ],
            out_specs=pl.BlockSpec((1, tile_b), lambda i: (0, i)),     # lane-dense
        ),
        compiler_params=pltpu.CompilerParams(
            dimension_semantics=("parallel",),
            vmem_limit_bytes=40 * 1024 * 1024,
        ),
    )(x, w1p, b1p, w2p, b2p, w3p, b3p)

    # Transposed row -> (B, 1) column (matches the PyTorch module).
    return out_row.reshape(B, 1)


# --------------------- deterministic parameter init -------------------------
def xavier_uniform(key, fan_in, fan_out, dtype=jnp.float32):
    # Matches nn.init.xavier_uniform_ (gain=1.0): U(-a, a), a = sqrt(6/(fan_in+fan_out))
    a = math.sqrt(6.0 / (fan_in + fan_out))
    return jax.random.uniform(key, (fan_in, fan_out), dtype=dtype, minval=-a, maxval=a)


def init_value_densenet_params(key, state_dim, hidden_sizes=(64, 64)):
    # init='xavier': xavier-uniform for weight matrices, zeros for biases
    # (mirrors initialize_weights in the PyTorch module).
    k1, k2, k3 = jax.random.split(key, 3)
    h1, h2 = hidden_sizes
    return {
        "w1": xavier_uniform(k1, state_dim, h1),
        "b1": jnp.zeros((1, h1), jnp.float32),
        "w2": xavier_uniform(k2, h1, h2),
        "b2": jnp.zeros((1, h2), jnp.float32),
        "w3": xavier_uniform(k3, h2, 1),
        "b3": jnp.zeros((1, 1), jnp.float32),
    }


# ---------------------------------- demo ------------------------------------
if __name__ == "__main__":
    key = jax.random.PRNGKey(0)
    kx, kp = jax.random.split(key)

    batch, state_dim = 300, 16     # small; deliberately not a tile multiple
    x = jax.random.normal(kx, (batch, state_dim), dtype=jnp.float32)
    params = init_value_densenet_params(kp, state_dim, hidden_sizes=(64, 64))

    td = _default_tanh_dtype()

    # Default tiling: auto-splits into >= 2 tiles, last tile overhangs B.
    fwd = jax.jit(lambda xx: value_densenet_forward(xx, params, tanh_dtype=td))
    value = jax.block_until_ready(fwd(x))
    assert value.shape == (batch, 1)

    # Small explicit tile: 3-step pipelined grid, overhanging last tile.
    fwd_small = jax.jit(
        lambda xx: value_densenet_forward(xx, params, tile_b=128, tanh_dtype=td))
    value_small = jax.block_until_ready(fwd_small(x))
    assert value_small.shape == (batch, 1)

    w1, b1, w2, b2, w3, b3 = (params[k] for k in ("w1", "b1", "w2", "b2", "w3", "b3"))

    # Reference 1: same mixed precision as the kernel (bf16 matmul inputs, f32
    # accumulation / bias, tanh in the same dtype) -- tight check of the kernel.
    bf = jnp.bfloat16
    a1 = jnp.dot(x.astype(bf), w1.astype(bf), preferred_element_type=jnp.float32) + b1
    h = jnp.tanh(a1.astype(td)).astype(bf)
    a2 = jnp.dot(h, w2.astype(bf), preferred_element_type=jnp.float32) + b2
    h = jnp.tanh(a2.astype(td)).astype(bf)
    ref_mixed = jnp.dot(h, w3.astype(bf), preferred_element_type=jnp.float32) + b3

    assert jnp.allclose(value, ref_mixed, atol=1e-2, rtol=1e-2), \
        float(jnp.max(jnp.abs(value - ref_mixed)))
    assert jnp.allclose(value_small, ref_mixed, atol=1e-2, rtol=1e-2), \
        float(jnp.max(jnp.abs(value_small - ref_mixed)))

    # Reference 2: pure-f32 module semantics -- loose check (bf16 matmul inputs
    # and bf16 tanh are an intentional, review-requested approximation).
    h = jnp.tanh(x @ w1 + b1)
    h = jnp.tanh(h @ w2 + b2)
    ref_f32 = h @ w3 + b3
    assert jnp.allclose(value, ref_f32, atol=1.5e-1, rtol=1.5e-1), \
        float(jnp.max(jnp.abs(value - ref_f32)))

    print("KERNEL_OK")
</pallas_src>

<mosaic_0001>
module attributes {stable_mosaic.version = 11 : i64} {
  func.func @value_densenet_kernel(%arg0: i32, %arg1: memref<256x16xf32, #tpu.memory_space<vmem>>, %arg2: memref<16x128xbf16, #tpu.memory_space<vmem>>, %arg3: memref<1x128xf32, #tpu.memory_space<vmem>>, %arg4: memref<128x128xbf16, #tpu.memory_space<vmem>>, %arg5: memref<1x128xf32, #tpu.memory_space<vmem>>, %arg6: memref<1x128xbf16, #tpu.memory_space<vmem>>, %arg7: memref<1x1xf32, #tpu.memory_space<smem>>, %arg8: memref<1x256xf32, #tpu.memory_space<vmem>>) attributes {dimension_semantics = [#tpu.dimension_semantics<parallel>], iteration_bounds = array<i64: 2>, scalar_prefetch = 0 : i64, scratch_operands = 0 : i64, tpu.core_type = #tpu.core_type<tc>, window_params = [{transform_indices = @transform_0, window_bounds = array<i64: 256, 16>}, {pipeline_mode = #tpu.pipeline_mode<synchronous>, transform_indices = @transform_1, window_bounds = array<i64: 16, 128>}, {pipeline_mode = #tpu.pipeline_mode<synchronous>, transform_indices = @transform_2, window_bounds = array<i64: 1, 128>}, {pipeline_mode = #tpu.pipeline_mode<synchronous>, transform_indices = @transform_3, window_bounds = array<i64: 128, 128>}, {pipeline_mode = #tpu.pipeline_mode<synchronous>, transform_indices = @transform_4, window_bounds = array<i64: 1, 128>}, {pipeline_mode = #tpu.pipeline_mode<synchronous>, transform_indices = @transform_5, window_bounds = array<i64: 1, 128>}, {transform_indices = @transform_6, window_bounds = array<i64: 1, 1>}, {transform_indices = @transform_7, window_bounds = array<i64: 1, 256>}]} {
    %c0 = arith.constant 0 : index
    %c0_0 = arith.constant 0 : index
    %0 = vector.load %arg1[%c0, %c0_0] : memref<256x16xf32, #tpu.memory_space<vmem>>, vector<256x16xf32>
    %1 = arith.truncf %0 : vector<256x16xf32> to vector<256x16xbf16>
    %c0_1 = arith.constant 0 : index
    %c0_2 = arith.constant 0 : index
    %2 = vector.load %arg2[%c0_1, %c0_2] : memref<16x128xbf16, #tpu.memory_space<vmem>>, vector<16x128xbf16>
    %cst = arith.constant dense<0.000000e+00> : vector<256x128xf32>
    %3 = tpu.matmul %1, %2, %cst {dimension_numbers = #tpu.dot_dimension_numbers<[1], [0], [0], [1], [0, 0, 1, 1], [], []>} : vector<256x16xbf16>, vector<16x128xbf16>, vector<256x128xf32> -> vector<256x128xf32>
    %c0_3 = arith.constant 0 : index
    %c0_4 = arith.constant 0 : index
    %4 = vector.load %arg3[%c0_3, %c0_4] : memref<1x128xf32, #tpu.memory_space<vmem>>, vector<1x128xf32>
    %5 = vector.broadcast %4 : vector<1x128xf32> to vector<256x128xf32>
    %6 = arith.addf %3, %5 : vector<256x128xf32>
    %7 = math.tanh %6 : vector<256x128xf32>
    %8 = arith.truncf %7 : vector<256x128xf32> to vector<256x128xbf16>
    %c0_5 = arith.constant 0 : index
    %c0_6 = arith.constant 0 : index
    %9 = vector.load %arg4[%c0_5, %c0_6] : memref<128x128xbf16, #tpu.memory_space<vmem>>, vector<128x128xbf16>
    %cst_7 = arith.constant dense<0.000000e+00> : vector<256x128xf32>
    %10 = tpu.matmul %8, %9, %cst_7 {dimension_numbers = #tpu.dot_dimension_numbers<[1], [0], [0], [1], [0, 0, 1, 1], [], []>} : vector<256x128xbf16>, vector<128x128xbf16>, vector<256x128xf32> -> vector<256x128xf32>
    %c0_8 = arith.constant 0 : index
    %c0_9 = arith.constant 0 : index
    %11 = vector.load %arg5[%c0_8, %c0_9] : memref<1x128xf32, #tpu.memory_space<vmem>>, vector<1x128xf32>
    %12 = vector.broadcast %11 : vector<1x128xf32> to vector<256x128xf32>
    %13 = arith.addf %10, %12 : vector<256x128xf32>
    %14 = math.tanh %13 : vector<256x128xf32>
    %15 = arith.truncf %14 : vector<256x128xf32> to vector<256x128xbf16>
    %c0_10 = arith.constant 0 : index
    %c0_11 = arith.constant 0 : index
    %16 = vector.load %arg6[%c0_10, %c0_11] : memref<1x128xbf16, #tpu.memory_space<vmem>>, vector<1x128xbf16>
    %cst_12 = arith.constant dense<0.000000e+00> : vector<1x256xf32>
    %17 = tpu.matmul %16, %15, %cst_12 {dimension_numbers = #tpu.dot_dimension_numbers<[1], [1], [0], [0], [0, 0, 1, 0], [], []>} : vector<1x128xbf16>, vector<256x128xbf16>, vector<1x256xf32> -> vector<1x256xf32>
    %c0_13 = arith.constant 0 : index
    %c0_14 = arith.constant 0 : index
    %18 = memref.load %arg7[%c0_13, %c0_14] : memref<1x1xf32, #tpu.memory_space<smem>>
    %19 = vector.broadcast %18 : f32 to vector<1x256xf32>
    %20 = arith.addf %17, %19 : vector<1x256xf32>
    %c0_15 = arith.constant 0 : index
    %c0_16 = arith.constant 0 : index
    %21 = vector.load %arg8[%c0_15, %c0_16] : memref<1x256xf32, #tpu.memory_space<vmem>>, vector<1x256xf32>
    tpu.vector_store %arg8[%c0_15, %c0_16], %20 {strides = array<i32>} : memref<1x256xf32, #tpu.memory_space<vmem>>, vector<1x256xf32>,
    return
  }
  func.func @transform_0(%arg0: i32) -> (i32, i32) {
    %c0_i32 = arith.constant 0 : i32
    %c0_i32_0 = arith.constant 0 : i32
    return %arg0, %c0_i32 : i32, i32
  }
  func.func @transform_1(%arg0: i32) -> (i32, i32) {
    %c0_i32 = arith.constant 0 : i32
    %c0_i32_0 = arith.constant 0 : i32
    %c0_i32_1 = arith.constant 0 : i32
    return %c0_i32, %c0_i32_0 : i32, i32
  }
  func.func @transform_2(%arg0: i32) -> (i32, i32) {
    %c0_i32 = arith.constant 0 : i32
    %c0_i32_0 = arith.constant 0 : i32
    %c0_i32_1 = arith.constant 0 : i32
    return %c0_i32, %c0_i32_0 : i32, i32
  }
  func.func @transform_3(%arg0: i32) -> (i32, i32) {
    %c0_i32 = arith.constant 0 : i32
    %c0_i32_0 = arith.constant 0 : i32
    %c0_i32_1 = arith.constant 0 : i32
    return %c0_i32, %c0_i32_0 : i32, i32
  }
  func.func @transform_4(%arg0: i32) -> (i32, i32) {
    %c0_i32 = arith.constant 0 : i32
    %c0_i32_0 = arith.constant 0 : i32
    %c0_i32_1 = arith.constant 0 : i32
    return %c0_i32, %c0_i32_0 : i32, i32
  }
  func.func @transform_5(%arg0: i32) -> (i32, i32) {
    %c0_i32 = arith.constant 0 : i32
    %c0_i32_0 = arith.constant 0 : i32
    %c0_i32_1 = arith.constant 0 : i32
    return %c0_i32, %c0_i32_0 : i32, i32
  }
  func.func @transform_6(%arg0: i32) -> (i32, i32) {
    %c0_i32 = arith.constant 0 : i32
    %c0_i32_0 = arith.constant 0 : i32
    %c0_i32_1 = arith.constant 0 : i32
    return %c0_i32, %c0_i32_0 : i32, i32
  }
  func.func @transform_7(%arg0: i32) -> (i32, i32) {
    %c0_i32 = arith.constant 0 : i32
    %c0_i32_0 = arith.constant 0 : i32
    return %c0_i32, %arg0 : i32, i32
  }
}

</mosaic_0001>

<llo_original>
// kernel: _lambda_.1
$region0: #{_lambda_.1}
  #allocation0 [shape = 'u32[]', space=smem, size = 0x4, offset = 0x4, fixed_abs, tag = 'smem constant byte address 0x4 - core index']
  #allocation1 [shape = 'u32[144,128]{1,0:T(1,128)}', space=vmem, size = 0x12000, scoped, tag = 'internal scratch']
  #allocation2 [shape = 'f32[1,1]{1,0:T(1,128)S(6)}', space=smem, size = 0x200, scoped, tag = 'scoped memory for _lambda_.1']
  %s0 = inlined_call_operand.vmem [shape: f32[300,16], index: 0, kind: input, shape index: {}]
  %s1 = inlined_call_operand.vmem [shape: bf16[16,128], index: 1, kind: input, shape index: {}]
  %s2 = inlined_call_operand.vmem [shape: f32[1,128], index: 2, kind: input, shape index: {}, may-alias: {2,4}]
  %s3 = inlined_call_operand.vmem [shape: bf16[128,128], index: 3, kind: input, shape index: {}]
  %s4 = inlined_call_operand.vmem [shape: f32[1,128], index: 4, kind: input, shape index: {}, may-alias: {2,4}]
  %s5 = inlined_call_operand.vmem [shape: bf16[1,128], index: 5, kind: input, shape index: {}]
  %s6 = inlined_call_operand.<no memory space> [shape: f32[1,1], index: 6, kind: input, shape index: {}]
  %s7 = inlined_call_operand.hbm [shape: f32[1,300], index: 7, kind: output, shape index: {}]
  %s8 = sld [smem:[#allocation0]]
  $region61: #{_lambda_.1} parent=0
    _
  %s10 = ssub.s32 1, %s8
  %s11 = scalar_select 0, %s10, %s8
  %12 = sst [smem:[#allocation2]] %s6
  $region1: #{_lambda_.1} parent=0
    #allocation3 [shape = 'u8[2048]{0}', space=vmem, size = 0x800, scoped, tag = 'output window, operand 0']
    #allocation4 [shape = 's32[2]{0}', space=sflag, size = 0x8, scoped, tag = 'scoped memory for _lambda_.1']
    %13 = vsyncpa [#allocation4], 0
    %s14 = scalar_lea.sflag [#allocation4], 1
    %15 = vsyncpa %s14, 0
    loop: start=0, step=1, limit=4
    $region2: #{_lambda_.1} parent=1 // loop_pre_header
      _
    $region3: #{_lambda_.1} parent=1 // loop_header
      %s17 = sphi 0, %s21
      %p18 = scmp.ge.s32.totalorder %s17, 4
      %s27 = sphi 0, %s29
      %s30 = sphi 0, %s27
      %s31 = sphi 0, %s30
      %s47 = sphi 0, %s31
      %s51 = sphi 0, %s51
      %s53 = sphi 0, %s51
      %s54 = sphi 0, %s53
      %s68 = sphi 0, %s54
      %s72 = sphi 0, %s72
      %s74 = sphi 0, %s72
      %s75 = sphi 0, %s74
      %s89 = sphi 0, %s75
      %s93 = sphi 0, %s93
      %s95 = sphi 0, %s93
      %s96 = sphi 0, %s95
      %s110 = sphi 0, %s96
      %s114 = sphi 0, %s114
      %s116 = sphi 0, %s114
      %s117 = sphi 0, %s116
      %s131 = sphi 0, %s117
      %s135 = sphi 0, %s135
      %s137 = sphi 0, %s135
      %s138 = sphi 0, %s137
      %s152 = sphi 0, %s138
      %s156 = sphi 0, %s156
      %s158 = sphi 0, %s156
      %s159 = sphi 0, %s158
      %s173 = sphi 0, %s159
      %s179 = sphi 0, %s181
      %s182 = sphi 0, %s179
      %s183 = sphi 0, %s182
      %s199 = sphi 0, %s183
    $region4: #{_lambda_.1} parent=1 // loop_header_branch
      %20 = sbr.rel (%p18) target = $region8
    $region5: #{_lambda_.1} parent=1 // loop_body
      %s22 = ssub.s32 %s17, 1
      %s23 = ssub.s32 %s17, 2
      %s24 = sadd.s32 %s17, 1
      %s25 = ssub.s32 %s17, %s24
      %p26 = scmp.eq.s32.totalorder %s25, 0
      %s28 = sadd.s32 %s27, 1
      %s29 = scalar_select %p26, %s27, %s28
      %p32 = pneg %p26
      %p33 = scmp.eq.s32.totalorder %s17, 1
      %p34 = por %p32, %p33
      %p35 = scmp.ne.s32.totalorder %s27, %s30
      %p36 = scmp.eq.s32.totalorder %s17, 0
      %p37 = por %p35, %p36
      %p38 = scmp.ne.s32.totalorder %s27, %s30
      %p39 = scmp.eq.s32.totalorder %s22, 1
      %p40 = por %p38, %p39
      %p41 = scmp.ne.s32.totalorder %s30, %s31
      %p42 = scmp.eq.s32.totalorder %s22, 0
      %p43 = por %p41, %p42
      %p44 = scmp.ne.s32.totalorder %s30, %s31
      %p45 = scmp.eq.s32.totalorder %s23, 1
      %p46 = por %p44, %p45
      %p48 = scmp.ne.s32.totalorder %s31, %s47
      %p49 = scmp.eq.s32.totalorder %s23, 0
      %p50 = por %p48, %p49
      %s52 = sadd.s32 %s51, 1
      %p55 = scmp.eq.s32.totalorder %s17, 1
      %p56 = scmp.ne.s32.totalorder %s51, %s53
      %p57 = scmp.eq.s32.totalorder %s17, 0
      %p58 = por %p56, %p57
      %p59 = scmp.ne.s32.totalorder %s51, %s53
      %p60 = scmp.eq.s32.totalorder %s22, 1
      %p61 = por %p59, %p60
      %p62 = scmp.ne.s32.totalorder %s53, %s54
      %p63 = scmp.eq.s32.totalorder %s22, 0
      %p64 = por %p62, %p63
      %p65 = scmp.ne.s32.totalorder %s53, %s54
      %p66 = scmp.eq.s32.totalorder %s23, 1
      %p67 = por %p65, %p66
      %p69 = scmp.ne.s32.totalorder %s54, %s68
      %p70 = scmp.eq.s32.totalorder %s23, 0
      %p71 = por %p69, %p70
      %s73 = sadd.s32 %s72, 1
      %p76 = scmp.eq.s32.totalorder %s17, 1
      %p77 = scmp.ne.s32.totalorder %s72, %s74
      %p78 = scmp.eq.s32.totalorder %s17, 0
      %p79 = por %p77, %p78
      %p80 = scmp.ne.s32.totalorder %s72, %s74
      %p81 = scmp.eq.s32.totalorder %s22, 1
      %p82 = por %p80, %p81
      %p83 = scmp.ne.s32.totalorder %s74, %s75
      %p84 = scmp.eq.s32.totalorder %s22, 0
      %p85 = por %p83, %p84
      %p86 = scmp.ne.s32.totalorder %s74, %s75
      %p87 = scmp.eq.s32.totalorder %s23, 1
      %p88 = por %p86, %p87
      %p90 = scmp.ne.s32.totalorder %s75, %s89
      %p91 = scmp.eq.s32.totalorder %s23, 0
      %p92 = por %p90, %p91
      %s94 = sadd.s32 %s93, 1
      %p97 = scmp.eq.s32.totalorder %s17, 1
      %p98 = scmp.ne.s32.totalorder %s93, %s95
      %p99 = scmp.eq.s32.totalorder %s17, 0
      %p100 = por %p98, %p99
      %p101 = scmp.ne.s32.totalorder %s93, %s95
      %p102 = scmp.eq.s32.totalorder %s22, 1
      %p103 = por %p101, %p102
      %p104 = scmp.ne.s32.totalorder %s95, %s96
      %p105 = scmp.eq.s32.totalorder %s22, 0
      %p106 = por %p104, %p105
      %p107 = scmp.ne.s32.totalorder %s95, %s96
      %p108 = scmp.eq.s32.totalorder %s23, 1
      %p109 = por %p107, %p108
      %p111 = scmp.ne.s32.totalorder %s96, %s110
      %p112 = scmp.eq.s32.totalorder %s23, 0
      %p113 = por %p111, %p112
      %s115 = sadd.s32 %s114, 1
      %p118 = scmp.eq.s32.totalorder %s17, 1
      %p119 = scmp.ne.s32.totalorder %s114, %s116
      %p120 = scmp.eq.s32.totalorder %s17, 0
      %p121 = por %p119, %p120
      %p122 = scmp.ne.s32.totalorder %s114, %s116
      %p123 = scmp.eq.s32.totalorder %s22, 1
      %p124 = por %p122, %p123
      %p125 = scmp.ne.s32.totalorder %s116, %s117
      %p126 = scmp.eq.s32.totalorder %s22, 0
      %p127 = por %p125, %p126
      %p128 = scmp.ne.s32.totalorder %s116, %s117
      %p129 = scmp.eq.s32.totalorder %s23, 1
      %p130 = por %p128, %p129
      %p132 = scmp.ne.s32.totalorder %s117, %s131
      %p133 = scmp.eq.s32.totalorder %s23, 0
      %p134 = por %p132, %p133
      %s136 = sadd.s32 %s135, 1
      %p139 = scmp.eq.s32.totalorder %s17, 1
      %p140 = scmp.ne.s32.totalorder %s135, %s137
      %p141 = scmp.eq.s32.totalorder %s17, 0
      %p142 = por %p140, %p141
      %p143 = scmp.ne.s32.totalorder %s135, %s137
      %p144 = scmp.eq.s32.totalorder %s22, 1
      %p145 = por %p143, %p144
      %p146 = scmp.ne.s32.totalorder %s137, %s138
      %p147 = scmp.eq.s32.totalorder %s22, 0
      %p148 = por %p146, %p147
      %p149 = scmp.ne.s32.totalorder %s137, %s138
      %p150 = scmp.eq.s32.totalorder %s23, 1
      %p151 = por %p149, %p150
      %p153 = scmp.ne.s32.totalorder %s138, %s152
      %p154 = scmp.eq.s32.totalorder %s23, 0
      %p155 = por %p153, %p154
      %s157 = sadd.s32 %s156, 1
      %p160 = scmp.eq.s32.totalorder %s17, 1
      %p161 = scmp.ne.s32.totalorder %s156, %s158
      %p162 = scmp.eq.s32.totalorder %s17, 0
      %p163 = por %p161, %p162
      %p164 = scmp.ne.s32.totalorder %s156, %s158
      %p165 = scmp.eq.s32.totalorder %s22, 1
      %p166 = por %p164, %p165
      %p167 = scmp.ne.s32.totalorder %s158, %s159
      %p168 = scmp.eq.s32.totalorder %s22, 0
      %p169 = por %p167, %p168
      %p170 = scmp.ne.s32.totalorder %s158, %s159
      %p171 = scmp.eq.s32.totalorder %s23, 1
      %p172 = por %p170, %p171
      %p174 = scmp.ne.s32.totalorder %s159, %s173
      %p175 = scmp.eq.s32.totalorder %s23, 0
      %p176 = por %p174, %p175
      %s177 = ssub.s32 %s17, %s24
      %p178 = scmp.eq.s32.totalorder %s177, 0
      %s180 = sadd.s32 %s179, 1
      %s181 = scalar_select %p178, %s179, %s180
      %p184 = pneg %p178
      %p185 = scmp.eq.s32.totalorder %s17, 1
      %p186 = por %p184, %p185
      %p187 = scmp.ne.s32.totalorder %s179, %s182
      %p188 = scmp.eq.s32.totalorder %s17, 0
      %p189 = por %p187, %p188
      %p190 = scmp.ne.s32.totalorder %s179, %s182
      %p191 = scmp.eq.s32.totalorder %s22, 1
      %p192 = por %p190, %p191
      %p193 = scmp.ne.s32.totalorder %s182, %s183
      %p194 = scmp.eq.s32.totalorder %s22, 0
      %p195 = por %p193, %p194
      %p196 = scmp.ne.s32.totalorder %s182, %s183
      %p197 = scmp.eq.s32.totalorder %s23, 1
      %p198 = por %p196, %p197
      %p200 = scmp.ne.s32.totalorder %s183, %s199
      %p201 = scmp.eq.s32.totalorder %s23, 0
      %p202 = por %p200, %p201
      %p203 = scmp.le.s32.totalorder 1, %s17
      %p204 = scmp.lt.s32.totalorder %s17, 3
      %p205 = pnand %p203, %p204
      %p206 = pneg %p205
      // Predicated region
      $region9: #{_lambda_.1} parent=5 // pred_check
        _
      $region10: #{_lambda_.1} parent=5 // pred_check_branch
        %208 = sbr.rel (%p205) target = $region12
      $region11: #{_lambda_.1} parent=5 // pred_region
        %s209 = ssub.s32 %s17, 1
        // Predicated region
        $region13: #{_lambda_.1} parent=11 // pred_check
          %p210 = pneg %p64
        $region14: #{_lambda_.1} parent=11 // pred_check_branch
          %212 = sbr.rel (%p210) target = $region16
        $region15: #{_lambda_.1} parent=11 // pred_region
          _
        $region16: #{_lambda_.1} parent=11 // pred_fallthru
          _
        // Predicated region
        $region17: #{_lambda_.1} parent=11 // pred_check
          %p213 = pneg %p85
        $region18: #{_lambda_.1} parent=11 // pred_check_branch
          %215 = sbr.rel (%p213) target = $region20
        $region19: #{_lambda_.1} parent=11 // pred_region
          _
        $region20: #{_lambda_.1} parent=11 // pred_fallthru
          _
        // Predicated region
        $region21: #{_lambda_.1} parent=11 // pred_check
          %p216 = pneg %p106
        $region22: #{_lambda_.1} parent=11 // pred_check_branch
          %218 = sbr.rel (%p216) target = $region24
        $region23: #{_lambda_.1} parent=11 // pred_region
          _
        $region24: #{_lambda_.1} parent=11 // pred_fallthru
          _
        // Predicated region
        $region25: #{_lambda_.1} parent=11 // pred_check
          %p219 = pneg %p127
        $region26: #{_lambda_.1} parent=11 // pred_check_branch
          %221 = sbr.rel (%p219) target = $region28
        $region27: #{_lambda_.1} parent=11 // pred_region
          _
        $region28: #{_lambda_.1} parent=11 // pred_fallthru
          _
        // Predicated region
        $region29: #{_lambda_.1} parent=11 // pred_check
          %p222 = pneg %p148
        $region30: #{_lambda_.1} parent=11 // pred_check_branch
          %224 = sbr.rel (%p222) target = $region32
        $region31: #{_lambda_.1} parent=11 // pred_region
          _
        $region32: #{_lambda_.1} parent=11 // pred_fallthru
          _
        // Predicated region
        $region33: #{_lambda_.1} parent=11 // pred_check
          %p225 = pneg %p169
        $region34: #{_lambda_.1} parent=11 // pred_check_branch
          %227 = sbr.rel (%p225) target = $region36
        $region35: #{_lambda_.1} parent=11 // pred_region
          _
        $region36: #{_lambda_.1} parent=11 // pred_fallthru
          _
      $region12: #{_lambda_.1} parent=5 // pred_fallthru
        _
      %p228 = scmp.lt.s32.totalorder %s17, 2
      // Predicated region
      $region37: #{_lambda_.1} parent=5 // pred_check
        %p229 = pneg %p228
      $region38: #{_lambda_.1} parent=5 // pred_check_branch
        %231 = sbr.rel (%p229) target = $region40
      $region39: #{_lambda_.1} parent=5 // pred_region
        // Predicated region
        $region41: #{_lambda_.1} parent=39 // pred_check
          %p232 = pneg %p37
        $region42: #{_lambda_.1} parent=39 // pred_check_branch
          %234 = sbr.rel (%p232) target = $region44
        $region43: #{_lambda_.1} parent=39 // pred_region
          %s235 = smul.u32 32, %s17
          %s236 = ssub.s32 38, %s235
          %p237 = scmp.lt.s32.totalorder %s236, 32
          %s238 = scalar_select %p237, %s236, 32
          %s239 = smul.u32 128, %s238
          %p240 = scmp.lt.s32.totalorder %s235, 37
          %s241 = scalar_select %p240, %s235, 37
          %s242 = smul.addr %s241, 8
          %s243 = scalar_lea.vmem %s0, %s242
          %s244 = smul.u32 32, %s17
          %s245 = ssub.s32 38, %s244
          %p246 = scmp.lt.s32.totalorder %s245, 32
          %s247 = scalar_select %p246, %s245, 32
          %s248 = smul.u32 128, %s247
        $region44: #{_lambda_.1} parent=39 // pred_fallthru
          _
      $region40: #{_lambda_.1} parent=5 // pred_fallthru
        _
      %p249 = scmp.le.s32.totalorder 1, %s17
      %p250 = scmp.lt.s32.totalorder %s17, 3
      %p251 = pnand %p249, %p250
      %p252 = pneg %p251
      // Predicated region
      $region45: #{_lambda_.1} parent=5 // pred_check
        _
      $region46: #{_lambda_.1} parent=5 // pred_check_branch
        %254 = sbr.rel (%p251) target = $region48
      $region47: #{_lambda_.1} parent=5 // pred_region
        %s255 = ssub.s32 %s17, 1
        %s256 = smul.u32 32, %s22
        %s257 = ssub.s32 38, %s256
        %p258 = scmp.lt.s32.totalorder %s257, 32
        %s259 = scalar_select %p258, %s257, 32
        %s260 = smul.u32 128, %s259
        %p261 = scmp.lt.s32.totalorder %s256, 37
        %s262 = scalar_select %p261, %s256, 37
        %s263 = smul.addr %s262, 8
        %s264 = scalar_lea.vmem %s0, %s263
        %p265 = pneg %p43
        %p266 = pneg %p40
        %p267 = pneg %p64
        %p268 = pneg %p61
        %p269 = pneg %p85
        %p270 = pneg %p82
        %p271 = pneg %p106
        %p272 = pneg %p103
        %p273 = pneg %p127
        %p274 = pneg %p124
        %p275 = pneg %p148
        %p276 = pneg %p145
        %p277 = pneg %p169
        %p278 = pneg %p166
        %p279 = pneg %p195
        %p280 = pneg %p192
        %s281 = sand.u32 %s182, 1
        %s282 = scalar_lea.sflag [#allocation4], %s281
        %s283 = sand.u32 %s182, 1
        %s284 = smul.addr %s283, 2
        %s285 = scalar_lea.vmem [#allocation3], %s284
        %s286 = smul.u32 32, %s22
        %s287 = ssub.s32 38, %s286
        %p288 = scmp.lt.s32.totalorder %s287, 32
        %s289 = scalar_select %p288, %s287, 32
        %s290 = smul.u32 128, %s289
        %p291 = scmp.lt.s32.totalorder %s286, 37
        %s292 = scalar_select %p291, %s286, 37
        %s293 = smul.addr %s292, 8
        %s294 = scalar_lea.vmem %s0, %s293
        %s295 = smul.u32 32, %s22
        %s296 = ssub.s32 38, %s295
        %p297 = scmp.lt.s32.totalorder %s296, 32
        %s298 = scalar_select %p297, %s296, 32
        %s299 = smul.u32 128, %s298
        %s300 = smul.u32 2, %s22
        %s301 = ssub.s32 3, %s300
        %p302 = scmp.lt.s32.totalorder %s301, 2
        %s303 = scalar_select %p302, %s301, 2
        %s304 = smul.u32 16, %s303
        %v306 = vld [vmem:[%s294] sm:$0xff]
        %v307 = vld [vmem:[%s294 + $0x8] sm:$0xff]
        %v308 = vld [vmem:[%s294 + $0x10] sm:$0xff]
        %v309 = vld [vmem:[%s294 + $0x18] sm:$0xff]
        %v310 = vld [vmem:[%s294 + $0x20] sm:$0xff]
        %v311 = vld [vmem:[%s294 + $0x28] sm:$0xff]
        %v312 = vld [vmem:[%s294 + $0x30] sm:$0xff]
        %v313 = vld [vmem:[%s294 + $0x38] sm:$0xff]
        %v314 = vld [vmem:[%s294 + $0x40] sm:$0xff]
        %v315 = vld [vmem:[%s294 + $0x48] sm:$0xff]
        %v316 = vld [vmem:[%s294 + $0x50] sm:$0xff]
        %v317 = vld [vmem:[%s294 + $0x58] sm:$0xff]
        %v318 = vld [vmem:[%s294 + $0x60] sm:$0xff]
        %v319 = vld [vmem:[%s294 + $0x68] sm:$0xff]
        %v320 = vld [vmem:[%s294 + $0x70] sm:$0xff]
        %v321 = vld [vmem:[%s294 + $0x78] sm:$0xff]
        %v322 = vld [vmem:[%s294 + $0x80] sm:$0xff]
        %v323 = vld [vmem:[%s294 + $0x88] sm:$0xff]
        %v324 = vld [vmem:[%s294 + $0x90] sm:$0xff]
        %v325 = vld [vmem:[%s294 + $0x98] sm:$0xff]
        %v326 = vld [vmem:[%s294 + $0xa0] sm:$0xff]
        %v327 = vld [vmem:[%s294 + $0xa8] sm:$0xff]
        %v328 = vld [vmem:[%s294 + $0xb0] sm:$0xff]
        %v329 = vld [vmem:[%s294 + $0xb8] sm:$0xff]
        %v330 = vld [vmem:[%s294 + $0xc0] sm:$0xff]
        %v331 = vld [vmem:[%s294 + $0xc8] sm:$0xff]
        %v332 = vld [vmem:[%s294 + $0xd0] sm:$0xff]
        %v333 = vld [vmem:[%s294 + $0xd8] sm:$0xff]
        %v334 = vld [vmem:[%s294 + $0xe0] sm:$0xff]
        %v335 = vld [vmem:[%s294 + $0xe8] sm:$0xff]
        %v336 = vld [vmem:[%s294 + $0xf0] sm:$0xff]
        %v337 = vld [vmem:[%s294 + $0xf8] sm:$0xff]
        %v338 = vpack.c.bf16 %v307, %v306
        %v339 = vpack.c.bf16 %v309, %v308
        %v340 = vpack.c.bf16 %v311, %v310
        %v341 = vpack.c.bf16 %v313, %v312
        %v342 = vpack.c.bf16 %v315, %v314
        %v343 = vpack.c.bf16 %v317, %v316
        %v344 = vpack.c.bf16 %v319, %v318
        %v345 = vpack.c.bf16 %v321, %v320
        %v346 = vpack.c.bf16 %v323, %v322
        %v347 = vpack.c.bf16 %v325, %v324
        %v348 = vpack.c.bf16 %v327, %v326
        %v349 = vpack.c.bf16 %v329, %v328
        %v350 = vpack.c.bf16 %v331, %v330
        %v351 = vpack.c.bf16 %v333, %v332
        %v352 = vpack.c.bf16 %v335, %v334
        %v353 = vpack.c.bf16 %v337, %v336
        %v354 = vld [vmem:[%s1] sm:$0xf]
        %v355 = vld [vmem:[%s1 + $0x4] sm:$0xf]
        %v356 = vld [vmem:[%s2] sm:$0x1]
        %v358 = vlaneseq
        %v359 = vshrl.u32 %v358, 7
        %v360 = vsub.s32 0, %v359
        %v361 = vrot.slane %v356, %v360
        %v365 = vunpack.c.l.b16 %v354
        %v366 = vunpack.c.l.b16 %v355
        %v367 = vpack.c.b16 %v366, %v365
        %vm369 = vcmask 130048
        %v371 = vsel %vm369, %v338, 0
        %v374 = vsel %vm369, %v339, 0
        %v377 = vsel %vm369, %v340, 0
        %v380 = vsel %vm369, %v341, 0
        %v383 = vsel %vm369, %v342, 0
        %v386 = vsel %vm369, %v343, 0
        %v389 = vsel %vm369, %v344, 0
        %v392 = vsel %vm369, %v345, 0
        %v395 = vsel %vm369, %v346, 0
        %v398 = vsel %vm369, %v347, 0
        %v401 = vsel %vm369, %v348, 0
        %v404 = vsel %vm369, %v349, 0
        %v407 = vsel %vm369, %v350, 0
        %v410 = vsel %vm369, %v351, 0
        %v413 = vsel %vm369, %v352, 0
        %v416 = vsel %vm369, %v353, 0
        %418 = vmatprep.subr.bf16.mxu0 0
        %419 = vmatpush1.bf16.msra.mxu0 0
        %420 = vmatprep.subr.bf16.mxu0 0
        %421 = vmatpush1.bf16.msra.mxu0 0
        %422 = vmatprep.subr.bf16.mxu0 0
        %423 = vmatpush1.bf16.msra.mxu0 0
        %424 = vmatprep.subr.bf16.mxu0 0
        %425 = vmatpush1.bf16.msra.mxu0 0
        %426 = vmatprep.subr.bf16.mxu0 0
        %427 = vmatpush1.bf16.msra.mxu0 0
        %428 = vmatprep.subr.bf16.mxu0 0
        %429 = vmatpush1.bf16.msra.mxu0 0
        %430 = vmatprep.subr.bf16.mxu0 0
        %431 = vmatpush1.bf16.msra.mxu0 0
        %432 = vmatprep.subr.bf16.mxu0 0
        %433 = vmatpush1.bf16.msra.mxu0 %v367
        %434 = vmatprep.subr.bf16.mxu0 0
        %435 = vmatpush2.bf16.msra.mxu0 0
        %436 = vmatprep.subr.bf16.mxu0 0
        %437 = vmatpush2.bf16.msra.mxu0 0
        %438 = vmatprep.subr.bf16.mxu0 0
        %439 = vmatpush2.bf16.msra.mxu0 0
        %440 = vmatprep.subr.bf16.mxu0 0
        %441 = vmatpush2.bf16.msra.mxu0 0
        %442 = vmatprep.subr.bf16.mxu0 0
        %443 = vmatpush2.bf16.msra.mxu0 0
        %444 = vmatprep.subr.bf16.mxu0 0
        %445 = vmatpush2.bf16.msra.mxu0 0
        %446 = vmatprep.subr.bf16.mxu0 0
        %447 = vmatpush2.bf16.msra.mxu0 0
        %448 = vmatprep.subr.bf16.mxu0 0
        %449 = vmatpush2.bf16.msra.mxu0 0
        %450 = vmatprep.mubr.bf16.mxu0 0
        %451 = vmatmul.mubr.bf16.gmra.mxu0 %v371
        %v452 = vpop.f32.mrf.mxu0
        %v453 = vadd.f32 %v361, %v452
        %v454 = vpop.f32.mrf.mxu0
        %v455 = vpop.f32.mrf.mxu0
        %v456 = vadd.f32 %v361, %v455
        %v457 = vpop.f32.mrf.mxu0
        %458 = vmatprep.mubr.bf16.mxu0 0
        %459 = vmatmul.mubr.bf16.gmra.mxu0 %v374
        %v460 = vpop.f32.mrf.mxu0
        %v461 = vadd.f32 %v361, %v460
        %v462 = vpop.f32.mrf.mxu0
        %v463 = vpop.f32.mrf.mxu0
        %v464 = vadd.f32 %v361, %v463
        %v465 = vpop.f32.mrf.mxu0
        %466 = vmatprep.mubr.bf16.mxu0 0
        %467 = vmatmul.mubr.bf16.gmra.mxu0 %v377
        %v468 = vpop.f32.mrf.mxu0
        %v469 = vadd.f32 %v361, %v468
        %v470 = vpop.f32.mrf.mxu0
        %v471 = vpop.f32.mrf.mxu0
        %v472 = vadd.f32 %v361, %v471
        %v473 = vpop.f32.mrf.mxu0
        %474 = vmatprep.mubr.bf16.mxu0 0
        %475 = vmatmul.mubr.bf16.gmra.mxu0 %v380
        %v476 = vpop.f32.mrf.mxu0
        %v477 = vadd.f32 %v361, %v476
        %v478 = vpop.f32.mrf.mxu0
        %v479 = vpop.f32.mrf.mxu0
        %v480 = vadd.f32 %v361, %v479
        %v481 = vpop.f32.mrf.mxu0
        %482 = vmatprep.mubr.bf16.mxu0 0
        %483 = vmatmul.mubr.bf16.gmra.mxu0 %v383
        %v484 = vpop.f32.mrf.mxu0
        %v485 = vadd.f32 %v361, %v484
        %v486 = vpop.f32.mrf.mxu0
        %v487 = vpop.f32.mrf.mxu0
        %v488 = vadd.f32 %v361, %v487
        %v489 = vpop.f32.mrf.mxu0
        %490 = vmatprep.mubr.bf16.mxu0 0
        %491 = vmatmul.mubr.bf16.gmra.mxu0 %v386
        %v492 = vpop.f32.mrf.mxu0
        %v493 = vadd.f32 %v361, %v492
        %v494 = vpop.f32.mrf.mxu0
        %v495 = vpop.f32.mrf.mxu0
        %v496 = vadd.f32 %v361, %v495
        %v497 = vpop.f32.mrf.mxu0
        %498 = vmatprep.mubr.bf16.mxu0 0
        %499 = vmatmul.mubr.bf16.gmra.mxu0 %v389
        %v500 = vpop.f32.mrf.mxu0
        %v501 = vadd.f32 %v361, %v500
        %v502 = vpop.f32.mrf.mxu0
        %v503 = vpop.f32.mrf.mxu0
        %v504 = vadd.f32 %v361, %v503
        %v505 = vpop.f32.mrf.mxu0
        %506 = vmatprep.mubr.bf16.mxu0 0
        %507 = vmatmul.mubr.bf16.gmra.mxu0 %v392
        %v508 = vpop.f32.mrf.mxu0
        %v509 = vadd.f32 %v361, %v508
        %v510 = vpop.f32.mrf.mxu0
        %v511 = vpop.f32.mrf.mxu0
        %v512 = vadd.f32 %v361, %v511
        %v513 = vpop.f32.mrf.mxu0
        %514 = vmatprep.mubr.bf16.mxu0 0
        %515 = vmatmul.mubr.bf16.gmra.mxu0 %v395
        %v516 = vpop.f32.mrf.mxu0
        %v517 = vadd.f32 %v361, %v516
        %v518 = vpop.f32.mrf.mxu0
        %v519 = vpop.f32.mrf.mxu0
        %v520 = vadd.f32 %v361, %v519
        %v521 = vpop.f32.mrf.mxu0
        %522 = vmatprep.mubr.bf16.mxu0 0
        %523 = vmatmul.mubr.bf16.gmra.mxu0 %v398
        %v524 = vpop.f32.mrf.mxu0
        %v525 = vadd.f32 %v361, %v524
        %v526 = vpop.f32.mrf.mxu0
        %v527 = vpop.f32.mrf.mxu0
        %v528 = vadd.f32 %v361, %v527
        %v529 = vpop.f32.mrf.mxu0
        %530 = vmatprep.mubr.bf16.mxu0 0
        %531 = vmatmul.mubr.bf16.gmra.mxu0 %v401
        %v532 = vpop.f32.mrf.mxu0
        %v533 = vadd.f32 %v361, %v532
        %v534 = vpop.f32.mrf.mxu0
        %v535 = vpop.f32.mrf.mxu0
        %v536 = vadd.f32 %v361, %v535
        %v537 = vpop.f32.mrf.mxu0
        %538 = vmatprep.mubr.bf16.mxu0 0
        %539 = vmatmul.mubr.bf16.gmra.mxu0 %v404
        %v540 = vpop.f32.mrf.mxu0
        %v541 = vadd.f32 %v361, %v540
        %v542 = vpop.f32.mrf.mxu0
        %v543 = vpop.f32.mrf.mxu0
        %v544 = vadd.f32 %v361, %v543
        %v545 = vpop.f32.mrf.mxu0
        %546 = vmatprep.mubr.bf16.mxu0 0
        %547 = vmatmul.mubr.bf16.gmra.mxu0 %v407
        %v548 = vpop.f32.mrf.mxu0
        %v549 = vadd.f32 %v361, %v548
        %v550 = vpop.f32.mrf.mxu0
        %v551 = vpop.f32.mrf.mxu0
        %v552 = vadd.f32 %v361, %v551
        %v553 = vpop.f32.mrf.mxu0
        %554 = vmatprep.mubr.bf16.mxu0 0
        %555 = vmatmul.mubr.bf16.gmra.mxu0 %v410
        %v556 = vpop.f32.mrf.mxu0
        %v557 = vadd.f32 %v361, %v556
        %v558 = vpop.f32.mrf.mxu0
        %v559 = vpop.f32.mrf.mxu0
        %v560 = vadd.f32 %v361, %v559
        %v561 = vpop.f32.mrf.mxu0
        %562 = vmatprep.mubr.bf16.mxu0 0
        %563 = vmatmul.mubr.bf16.gmra.mxu0 %v413
        %v564 = vpop.f32.mrf.mxu0
        %v565 = vadd.f32 %v361, %v564
        %v566 = vpop.f32.mrf.mxu0
        %v567 = vpop.f32.mrf.mxu0
        %v568 = vadd.f32 %v361, %v567
        %v569 = vpop.f32.mrf.mxu0
        %570 = vmatprep.mubr.bf16.mxu0 0
        %571 = vmatmul.mubr.bf16.gmra.mxu0 %v416
        %v572 = vpop.f32.mrf.mxu0
        %v573 = vadd.f32 %v361, %v572
        %v574 = vpop.f32.mrf.mxu0
        %v575 = vpop.f32.mrf.mxu0
        %v576 = vadd.f32 %v361, %v575
        %v577 = vpop.f32.mrf.mxu0
        %578 = vdwg.mxu0
        %v579 = vtanh.pop %v453
        %v580 = vtanh.pop %v456
        %v581 = vtanh.pop %v461
        %v582 = vtanh.pop %v464
        %v583 = vtanh.pop %v469
        %v584 = vtanh.pop %v472
        %v585 = vtanh.pop %v477
        %v586 = vtanh.pop %v480
        %v587 = vtanh.pop %v485
        %v588 = vtanh.pop %v488
        %v589 = vtanh.pop %v493
        %v590 = vtanh.pop %v496
        %v591 = vtanh.pop %v501
        %v592 = vtanh.pop %v504
        %v593 = vtanh.pop %v509
        %v594 = vtanh.pop %v512
        %v595 = vtanh.pop %v517
        %v596 = vtanh.pop %v520
        %v597 = vtanh.pop %v525
        %v598 = vtanh.pop %v528
        %v599 = vtanh.pop %v533
        %v600 = vtanh.pop %v536
        %v601 = vtanh.pop %v541
        %v602 = vtanh.pop %v544
        %v603 = vtanh.pop %v549
        %v604 = vtanh.pop %v552
        %v605 = vtanh.pop %v557
        %v606 = vtanh.pop %v560
        %v607 = vtanh.pop %v565
        %v608 = vtanh.pop %v568
        %v609 = vtanh.pop %v573
        %v610 = vtanh.pop %v576
        %v611 = vpack.c.bf16 %v580, %v579
        %v612 = vpack.c.bf16 %v582, %v581
        %v613 = vpack.c.bf16 %v584, %v583
        %v614 = vpack.c.bf16 %v586, %v585
        %v615 = vpack.c.bf16 %v588, %v587
        %v616 = vpack.c.bf16 %v590, %v589
        %v617 = vpack.c.bf16 %v592, %v591
        %v618 = vpack.c.bf16 %v594, %v593
        %v619 = vpack.c.bf16 %v596, %v595
        %v620 = vpack.c.bf16 %v598, %v597
        %v621 = vpack.c.bf16 %v600, %v599
        %v622 = vpack.c.bf16 %v602, %v601
        %v623 = vpack.c.bf16 %v604, %v603
        %v624 = vpack.c.bf16 %v606, %v605
        %v625 = vpack.c.bf16 %v608, %v607
        %v626 = vpack.c.bf16 %v610, %v609
        %v627 = vld [vmem:[%s3] sm:$0xf]
        %v628 = vld [vmem:[%s3 + $0x4] sm:$0xf]
        %v629 = vld [vmem:[%s3 + $0x8] sm:$0xf]
        %v630 = vld [vmem:[%s3 + $0xc] sm:$0xf]
        %v631 = vld [vmem:[%s3 + $0x10] sm:$0xf]
        %v632 = vld [vmem:[%s3 + $0x14] sm:$0xf]
        %v633 = vld [vmem:[%s3 + $0x18] sm:$0xf]
        %v634 = vld [vmem:[%s3 + $0x1c] sm:$0xf]
        %v635 = vld [vmem:[%s3 + $0x20] sm:$0xf]
        %v636 = vld [vmem:[%s3 + $0x24] sm:$0xf]
        %v637 = vld [vmem:[%s3 + $0x28] sm:$0xf]
        %v638 = vld [vmem:[%s3 + $0x2c] sm:$0xf]
        %v639 = vld [vmem:[%s3 + $0x30] sm:$0xf]
        %v640 = vld [vmem:[%s3 + $0x34] sm:$0xf]
        %v641 = vld [vmem:[%s3 + $0x38] sm:$0xf]
        %v642 = vld [vmem:[%s3 + $0x3c] sm:$0xf]
        %v643 = vld [vmem:[%s4] sm:$0x1]
        %v645 = vlaneseq
        %v646 = vshrl.u32 %v645, 7
        %v647 = vsub.s32 0, %v646
        %v648 = vrot.slane %v643, %v647
        %v666 = vunpack.c.l.b16 %v627
        %v667 = vunpack.c.l.b16 %v628
        %v668 = vunpack.c.l.b16 %v629
        %v669 = vunpack.c.l.b16 %v630
        %v670 = vunpack.c.l.b16 %v631
        %v671 = vunpack.c.l.b16 %v632
        %v672 = vunpack.c.l.b16 %v633
        %v673 = vunpack.c.l.b16 %v634
        %v674 = vunpack.c.l.b16 %v635
        %v675 = vunpack.c.l.b16 %v636
        %v676 = vunpack.c.l.b16 %v637
        %v677 = vunpack.c.l.b16 %v638
        %v678 = vunpack.c.l.b16 %v639
        %v679 = vunpack.c.l.b16 %v640
        %v680 = vunpack.c.l.b16 %v641
        %v681 = vunpack.c.l.b16 %v642
        %v682 = vpack.c.b16 %v667, %v666
        %v683 = vpack.c.b16 %v669, %v668
        %v684 = vpack.c.b16 %v671, %v670
        %v685 = vpack.c.b16 %v673, %v672
        %v686 = vpack.c.b16 %v675, %v674
        %v687 = vpack.c.b16 %v677, %v676
        %v688 = vpack.c.b16 %v679, %v678
        %v689 = vpack.c.b16 %v681, %v680
        %698 = vmatprep.subr.bf16.mxu0 0
        %699 = vmatpush1.bf16.msra.mxu0 %v689
        %700 = vmatprep.subr.bf16.mxu0 0
        %701 = vmatpush1.bf16.msra.mxu0 %v688
        %702 = vmatprep.subr.bf16.mxu0 0
        %703 = vmatpush1.bf16.msra.mxu0 %v687
        %704 = vmatprep.subr.bf16.mxu0 0
        %705 = vmatpush1.bf16.msra.mxu0 %v686
        %706 = vmatprep.subr.bf16.mxu0 0
        %707 = vmatpush1.bf16.msra.mxu0 %v685
        %708 = vmatprep.subr.bf16.mxu0 0
        %709 = vmatpush1.bf16.msra.mxu0 %v684
        %710 = vmatprep.subr.bf16.mxu0 0
        %711 = vmatpush1.bf16.msra.mxu0 %v683
        %712 = vmatprep.subr.bf16.mxu0 0
        %713 = vmatpush1.bf16.msra.mxu0 %v682
        %714 = vmatprep.subr.bf16.mxu0 0
        %715 = vmatpush2.bf16.msra.mxu0 0
        %716 = vmatprep.subr.bf16.mxu0 0
        %717 = vmatpush2.bf16.msra.mxu0 0
        %718 = vmatprep.subr.bf16.mxu0 0
        %719 = vmatpush2.bf16.msra.mxu0 0
        %720 = vmatprep.subr.bf16.mxu0 0
        %721 = vmatpush2.bf16.msra.mxu0 0
        %722 = vmatprep.subr.bf16.mxu0 0
        %723 = vmatpush2.bf16.msra.mxu0 0
        %724 = vmatprep.subr.bf16.mxu0 0
        %725 = vmatpush2.bf16.msra.mxu0 0
        %726 = vmatprep.subr.bf16.mxu0 0
        %727 = vmatpush2.bf16.msra.mxu0 0
        %728 = vmatprep.subr.bf16.mxu0 0
        %729 = vmatpush2.bf16.msra.mxu0 0
        %730 = vmatprep.mubr.bf16.mxu0 0
        %731 = vmatmul.mubr.bf16.gmra.mxu0 %v611
        %v732 = vpop.f32.mrf.mxu0
        %v733 = vadd.f32 %v648, %v732
        %v734 = vpop.f32.mrf.mxu0
        %v735 = vpop.f32.mrf.mxu0
        %v736 = vadd.f32 %v648, %v735
        %v737 = vpop.f32.mrf.mxu0
        %738 = vmatprep.mubr.bf16.mxu0 0
        %739 = vmatmul.mubr.bf16.gmra.mxu0 %v612
        %v740 = vpop.f32.mrf.mxu0
        %v741 = vadd.f32 %v648, %v740
        %v742 = vpop.f32.mrf.mxu0
        %v743 = vpop.f32.mrf.mxu0
        %v744 = vadd.f32 %v648, %v743
        %v745 = vpop.f32.mrf.mxu0
        %746 = vmatprep.mubr.bf16.mxu0 0
        %747 = vmatmul.mubr.bf16.gmra.mxu0 %v613
        %v748 = vpop.f32.mrf.mxu0
        %v749 = vadd.f32 %v648, %v748
        %v750 = vpop.f32.mrf.mxu0
        %v751 = vpop.f32.mrf.mxu0
        %v752 = vadd.f32 %v648, %v751
        %v753 = vpop.f32.mrf.mxu0
        %754 = vmatprep.mubr.bf16.mxu0 0
        %755 = vmatmul.mubr.bf16.gmra.mxu0 %v614
        %v756 = vpop.f32.mrf.mxu0
        %v757 = vadd.f32 %v648, %v756
        %v758 = vpop.f32.mrf.mxu0
        %v759 = vpop.f32.mrf.mxu0
        %v760 = vadd.f32 %v648, %v759
        %v761 = vpop.f32.mrf.mxu0
        %762 = vmatprep.mubr.bf16.mxu0 0
        %763 = vmatmul.mubr.bf16.gmra.mxu0 %v615
        %v764 = vpop.f32.mrf.mxu0
        %v765 = vadd.f32 %v648, %v764
        %v766 = vpop.f32.mrf.mxu0
        %v767 = vpop.f32.mrf.mxu0
        %v768 = vadd.f32 %v648, %v767
        %v769 = vpop.f32.mrf.mxu0
        %770 = vmatprep.mubr.bf16.mxu0 0
        %771 = vmatmul.mubr.bf16.gmra.mxu0 %v616
        %v772 = vpop.f32.mrf.mxu0
        %v773 = vadd.f32 %v648, %v772
        %v774 = vpop.f32.mrf.mxu0
        %v775 = vpop.f32.mrf.mxu0
        %v776 = vadd.f32 %v648, %v775
        %v777 = vpop.f32.mrf.mxu0
        %778 = vmatprep.mubr.bf16.mxu0 0
        %779 = vmatmul.mubr.bf16.gmra.mxu0 %v617
        %v780 = vpop.f32.mrf.mxu0
        %v781 = vadd.f32 %v648, %v780
        %v782 = vpop.f32.mrf.mxu0
        %v783 = vpop.f32.mrf.mxu0
        %v784 = vadd.f32 %v648, %v783
        %v785 = vpop.f32.mrf.mxu0
        %786 = vmatprep.mubr.bf16.mxu0 0
        %787 = vmatmul.mubr.bf16.gmra.mxu0 %v618
        %v788 = vpop.f32.mrf.mxu0
        %v789 = vadd.f32 %v648, %v788
        %v790 = vpop.f32.mrf.mxu0
        %v791 = vpop.f32.mrf.mxu0
        %v792 = vadd.f32 %v648, %v791
        %v793 = vpop.f32.mrf.mxu0
        %794 = vmatprep.mubr.bf16.mxu0 0
        %795 = vmatmul.mubr.bf16.gmra.mxu0 %v619
        %v796 = vpop.f32.mrf.mxu0
        %v797 = vadd.f32 %v648, %v796
        %v798 = vpop.f32.mrf.mxu0
        %v799 = vpop.f32.mrf.mxu0
        %v800 = vadd.f32 %v648, %v799
        %v801 = vpop.f32.mrf.mxu0
        %802 = vmatprep.mubr.bf16.mxu0 0
        %803 = vmatmul.mubr.bf16.gmra.mxu0 %v620
        %v804 = vpop.f32.mrf.mxu0
        %v805 = vadd.f32 %v648, %v804
        %v806 = vpop.f32.mrf.mxu0
        %v807 = vpop.f32.mrf.mxu0
        %v808 = vadd.f32 %v648, %v807
        %v809 = vpop.f32.mrf.mxu0
        %810 = vmatprep.mubr.bf16.mxu0 0
        %811 = vmatmul.mubr.bf16.gmra.mxu0 %v621
        %v812 = vpop.f32.mrf.mxu0
        %v813 = vadd.f32 %v648, %v812
        %v814 = vpop.f32.mrf.mxu0
        %v815 = vpop.f32.mrf.mxu0
        %v816 = vadd.f32 %v648, %v815
        %v817 = vpop.f32.mrf.mxu0
        %818 = vmatprep.mubr.bf16.mxu0 0
        %819 = vmatmul.mubr.bf16.gmra.mxu0 %v622
        %v820 = vpop.f32.mrf.mxu0
        %v821 = vadd.f32 %v648, %v820
        %v822 = vpop.f32.mrf.mxu0
        %v823 = vpop.f32.mrf.mxu0
        %v824 = vadd.f32 %v648, %v823
        %v825 = vpop.f32.mrf.mxu0
        %826 = vmatprep.mubr.bf16.mxu0 0
        %827 = vmatmul.mubr.bf16.gmra.mxu0 %v623
        %v828 = vpop.f32.mrf.mxu0
        %v829 = vadd.f32 %v648, %v828
        %v830 = vpop.f32.mrf.mxu0
        %v831 = vpop.f32.mrf.mxu0
        %v832 = vadd.f32 %v648, %v831
        %v833 = vpop.f32.mrf.mxu0
        %834 = vmatprep.mubr.bf16.mxu0 0
        %835 = vmatmul.mubr.bf16.gmra.mxu0 %v624
        %v836 = vpop.f32.mrf.mxu0
        %v837 = vadd.f32 %v648, %v836
        %v838 = vpop.f32.mrf.mxu0
        %v839 = vpop.f32.mrf.mxu0
        %v840 = vadd.f32 %v648, %v839
        %v841 = vpop.f32.mrf.mxu0
        %842 = vmatprep.mubr.bf16.mxu0 0
        %843 = vmatmul.mubr.bf16.gmra.mxu0 %v625
        %v844 = vpop.f32.mrf.mxu0
        %v845 = vadd.f32 %v648, %v844
        %v846 = vpop.f32.mrf.mxu0
        %v847 = vpop.f32.mrf.mxu0
        %v848 = vadd.f32 %v648, %v847
        %v849 = vpop.f32.mrf.mxu0
        %850 = vmatprep.mubr.bf16.mxu0 0
        %851 = vmatmul.mubr.bf16.gmra.mxu0 %v626
        %v852 = vpop.f32.mrf.mxu0
        %v853 = vadd.f32 %v648, %v852
        %v854 = vpop.f32.mrf.mxu0
        %v855 = vpop.f32.mrf.mxu0
        %v856 = vadd.f32 %v648, %v855
        %v857 = vpop.f32.mrf.mxu0
        %858 = vdwg.mxu0
        %v859 = vtanh.pop %v733
        %v860 = vtanh.pop %v736
        %v861 = vtanh.pop %v741
        %v862 = vtanh.pop %v744
        %v863 = vtanh.pop %v749
        %v864 = vtanh.pop %v752
        %v865 = vtanh.pop %v757
        %v866 = vtanh.pop %v760
        %v867 = vtanh.pop %v765
        %v868 = vtanh.pop %v768
        %v869 = vtanh.pop %v773
        %v870 = vtanh.pop %v776
        %v871 = vtanh.pop %v781
        %v872 = vtanh.pop %v784
        %v873 = vtanh.pop %v789
        %v874 = vtanh.pop %v792
        %v875 = vtanh.pop %v797
        %v876 = vtanh.pop %v800
        %v877 = vtanh.pop %v805
        %v878 = vtanh.pop %v808
        %v879 = vtanh.pop %v813
        %v880 = vtanh.pop %v816
        %v881 = vtanh.pop %v821
        %v882 = vtanh.pop %v824
        %v883 = vtanh.pop %v829
        %v884 = vtanh.pop %v832
        %v885 = vtanh.pop %v837
        %v886 = vtanh.pop %v840
        %v887 = vtanh.pop %v845
        %v888 = vtanh.pop %v848
        %v889 = vtanh.pop %v853
        %v890 = vtanh.pop %v856
        %v891 = vpack.c.bf16 %v860, %v859
        %v892 = vpack.c.bf16 %v862, %v861
        %v893 = vpack.c.bf16 %v864, %v863
        %v894 = vpack.c.bf16 %v866, %v865
        %v895 = vpack.c.bf16 %v868, %v867
        %v896 = vpack.c.bf16 %v870, %v869
        %v897 = vpack.c.bf16 %v872, %v871
        %v898 = vpack.c.bf16 %v874, %v873
        %v899 = vpack.c.bf16 %v876, %v875
        %v900 = vpack.c.bf16 %v878, %v877
        %v901 = vpack.c.bf16 %v880, %v879
        %v902 = vpack.c.bf16 %v882, %v881
        %v903 = vpack.c.bf16 %v884, %v883
        %v904 = vpack.c.bf16 %v886, %v885
        %v905 = vpack.c.bf16 %v888, %v887
        %v906 = vpack.c.bf16 %v890, %v889
        %v907 = vld [vmem:[%s5] sm:$0x1]
        %s908 = sld [smem:[#allocation2]]
        %v909 = vstv %s908
        %910 = vmatprep.subr.bf16.mxu0 0
        %911 = vmatpush1.bf16.xpose.msra.mxu0 %v898
        %912 = vmatprep.subr.bf16.mxu0 0
        %913 = vmatpush1.bf16.xpose.msra.mxu0 %v897
        %914 = vmatprep.subr.bf16.mxu0 0
        %915 = vmatpush1.bf16.xpose.msra.mxu0 %v896
        %916 = vmatprep.subr.bf16.mxu0 0
        %917 = vmatpush1.bf16.xpose.msra.mxu0 %v895
        %918 = vmatprep.subr.bf16.mxu0 0
        %919 = vmatpush1.bf16.xpose.msra.mxu0 %v894
        %920 = vmatprep.subr.bf16.mxu0 0
        %921 = vmatpush1.bf16.xpose.msra.mxu0 %v893
        %922 = vmatprep.subr.bf16.mxu0 0
        %923 = vmatpush1.bf16.xpose.msra.mxu0 %v892
        %924 = vmatprep.subr.bf16.mxu0 0
        %925 = vmatpush1.bf16.xpose.msra.mxu0 %v891
        %926 = vmatprep.subr.bf16.mxu0 0
        %927 = vmatpush2.bf16.xpose.msra.mxu0 %v906
        %928 = vmatprep.subr.bf16.mxu0 0
        %929 = vmatpush2.bf16.xpose.msra.mxu0 %v905
        %930 = vmatprep.subr.bf16.mxu0 0
        %931 = vmatpush2.bf16.xpose.msra.mxu0 %v904
        %932 = vmatprep.subr.bf16.mxu0 0
        %933 = vmatpush2.bf16.xpose.msra.mxu0 %v903
        %934 = vmatprep.subr.bf16.mxu0 0
        %935 = vmatpush2.bf16.xpose.msra.mxu0 %v902
        %936 = vmatprep.subr.bf16.mxu0 0
        %937 = vmatpush2.bf16.xpose.msra.mxu0 %v901
        %938 = vmatprep.subr.bf16.mxu0 0
        %939 = vmatpush2.bf16.xpose.msra.mxu0 %v900
        %940 = vmatprep.subr.bf16.mxu0 0
        %941 = vmatpush2.bf16.xpose.msra.mxu0 %v899
        %942 = vmatprep.mubr.bf16.mxu0 0
        %943 = vmatmul.mubr.bf16.gmra.mxu0 %v907
        %v944 = vpop.f32.mrf.mxu0
        %v945 = vadd.f32 %v909, %v944
        %v946 = vpop.f32.mrf.mxu0
        %v947 = vadd.f32 %v909, %v946
        %v948 = vpop.f32.mrf.mxu0
        %v949 = vpop.f32.mrf.mxu0
        %950 = vdwg.mxu0
        %v953 = vcombine.low %v945, %v947
        %v955 = vunpack.c.l.s4 1966171168
        %v956 = vunpack.c.0.s8 %v955
        %v957 = vlaneseq
        %v958 = vshrl.u32 %v957, 7
        %v959 = vsub.s32 %v956, %v958
        %v960 = vrot.slane %v953, %v959
        %v962 = vunpack.c.l.s4 1966171168
        %v963 = vunpack.c.0.s8 %v962
        %v964 = vlaneseq
        %v965 = vshrl.u32 %v964, 7
        %v966 = vsub.s32 %v963, %v965
        %v967 = vrot.slane %v960, %v966
        %v969 = vlaneseq
        %vm970 = vcmp.ge.s32.totalorder %v969, 0
        %vm971 = vcmp.lt.s32.totalorder %v969, 256
        %vm972 = vmand %vm970, %vm971
        %973 = vst.msk [vmem:[%s285] sm:$0x3] %vm972, %v967
        %s974 = sand.u32 %s182, 1
        %s975 = scalar_lea.sflag [#allocation4], %s974
        %s976 = sand.u32 %s182, 1
        %s977 = smul.addr %s976, 2
        %s978 = scalar_lea.vmem [#allocation3], %s977
        // Predicated region
        $region49: #{_lambda_.1} parent=47 // pred_check
          %p979 = pneg %p192
        $region50: #{_lambda_.1} parent=47 // pred_check_branch
          %981 = sbr.rel (%p979) target = $region52
        $region51: #{_lambda_.1} parent=47 // pred_region
          %s982 = smul.u32 2, %s22
          %s983 = ssub.s32 3, %s982
          %p984 = scmp.lt.s32.totalorder %s983, 2
          %s985 = scalar_select %p984, %s983, 2
          %s986 = smul.u32 16, %s985
          %s988 = ssub.s32 32, %s986
          %989 = vsyncadd %s975, %s988
          %p990 = scmp.ne.s32.totalorder 0, %s986
          %s991 = smul.addr %s982, 16
          %s992 = scalar_lea.hbm %s7, %s991
          %s993 = sshll.u32 %s985, 4
          %s994 = sshll.u32 %s978, 4
          %s995 = int_to_ptr.vmem [resolvable:$true] %s994
          %997 = dma.vmem_to_hbm [thread:$0]  (%p990), %s995, %s993, %s992, %s975
        $region52: #{_lambda_.1} parent=47 // pred_fallthru
          _
      $region48: #{_lambda_.1} parent=5 // pred_fallthru
        _
      %p998 = scmp.le.s32.totalorder 2, %s17
      // Predicated region
      $region53: #{_lambda_.1} parent=5 // pred_check
        %p999 = pneg %p998
      $region54: #{_lambda_.1} parent=5 // pred_check_branch
        %1001 = sbr.rel (%p999) target = $region56
      $region55: #{_lambda_.1} parent=5 // pred_region
        %s1002 = ssub.s32 %s17, 2
        // Predicated region
        $region57: #{_lambda_.1} parent=55 // pred_check
          %p1003 = pneg %p198
        $region58: #{_lambda_.1} parent=55 // pred_check_branch
          %1005 = sbr.rel (%p1003) target = $region60
        $region59: #{_lambda_.1} parent=55 // pred_region
          %s1006 = sand.u32 %s183, 1
          %s1007 = scalar_lea.sflag [#allocation4], %s1006
          %s1008 = sand.u32 %s183, 1
          %s1009 = smul.addr %s1008, 2
          %s1010 = scalar_lea.vmem [#allocation3], %s1009
          %1011 = dma.done %s1007, 32
        $region60: #{_lambda_.1} parent=55 // pred_fallthru
          _
      $region56: #{_lambda_.1} parent=5 // pred_fallthru
        _
    $region6: #{_lambda_.1} parent=1 // loop_footer
      %s21 = sadd.s32 1, %s17
    $region7: #{_lambda_.1} parent=1 // loop_footer_branch
      %16 = sbr.rel target = $region3
    $region8: #{_lambda_.1} parent=1 // loop_exit
      _
    %1012 = vsyncpa [#allocation4], 1
    %s1013 = scalar_lea.sflag [#allocation4], 1
    %1014 = vsyncpa %s1013, 1

</llo_original>
